<compile_context>
chip_gen: v7x
topology: tpu7x:2x2x1
jax: 0.10.0
libtpu: 0.0.40
codegen_flags: <defaults>
</compile_context>

<pallas_src>
import functools

import jax
import jax.numpy as jnp
from jax.experimental import pallas as pl
from jax.experimental.pallas import tpu as pltpu


def coupling_kernel(xT_ref, mask_ref, w1_ref, b1_ref, w2s_ref, w2t_ref,
                    out_ref, *, direct, hidden):
    xT = xT_ref[...]                      # (D, TB) f32, batch on lanes
    mask = mask_ref[...]                  # (D, 1)  f32
    inv_mask = jnp.broadcast_to(1.0 - mask, xT.shape)   # hoisted, reused twice

    masked = xT * mask                    # (D, TB)

    # Fused RFFN first layers (scale & translate together):
    #   (2H, D) @ (D, TB) + (2H, 1)  ->  cos  ->  (2H, TB)
    h = jnp.cos(
        jnp.dot(w1_ref[...], masked, preferred_element_type=jnp.float32)
        + b1_ref[...]
    )
    hs = h[:hidden, :]                    # (H, TB) static slice (free)
    ht = h[hidden:, :]                    # (H, TB)

    # Second layers: (D, H) @ (H, TB) -> (D, TB)
    log_s = jnp.dot(w2s_ref[...], hs, preferred_element_type=jnp.float32) * inv_mask
    t = jnp.dot(w2t_ref[...], ht, preferred_element_type=jnp.float32) * inv_mask

    if direct:
        out_ref[...] = xT * jnp.exp(log_s) + t
    else:
        out_ref[...] = (xT - t) * jnp.exp(-log_s)


def _coupling_layer_forward(x, mask, params, mode="direct", block_b=512):
    """x: (B, D); mask: (D,); params: RFFN params in PyTorch-native layout."""
    B, D = x.shape
    H = params["scale_coeff"].shape[0]    # nfeat (num_hidden)

    # --- layout glue (constant-folded under jit; no per-call weight transposes
    #     of the big matmul weights — they are used in native (out, in) form) ---
    w1 = jnp.concatenate([params["scale_coeff"], params["trans_coeff"]],
                         axis=0).astype(jnp.float32)            # (2H, D)
    b1 = jnp.concatenate([params["scale_offset"], params["trans_offset"]],
                         axis=1).reshape(2 * H, 1).astype(jnp.float32)  # (2H, 1)
    w2s = params["scale_out"].astype(jnp.float32)               # (D, H)
    w2t = params["trans_out"].astype(jnp.float32)               # (D, H)
    maskT = mask.reshape(D, 1).astype(jnp.float32)              # (D, 1)

    # Batch tiling: lane-dense tiles of TB columns (multiple of 128).
    tb = min(block_b, max(128, ((B + 127) // 128) * 128))
    b_pad = pl.cdiv(B, tb) * tb
    xp = x.astype(jnp.float32)
    if b_pad != B:
        xp = jnp.pad(xp, ((0, b_pad - B), (0, 0)))
    xT = xp.T                                                   # (D, B_pad)

    kernel = functools.partial(coupling_kernel,
                               direct=(mode == "direct"), hidden=H)

    resident = lambda i: (0, 0)           # weights/mask stay put across grid
    grid_spec = pltpu.PrefetchScalarGridSpec(
        num_scalar_prefetch=0,
        grid=(b_pad // tb,),
        in_specs=[
            pl.BlockSpec((D, tb), lambda i: (0, i)),      # x^T tile
            pl.BlockSpec((D, 1), resident),               # mask
            pl.BlockSpec((2 * H, D), resident),           # fused first-layer W
            pl.BlockSpec((2 * H, 1), resident),           # fused first-layer b
            pl.BlockSpec((D, H), resident),               # scale out W
            pl.BlockSpec((D, H), resident),               # translate out W
        ],
        out_specs=pl.BlockSpec((D, tb), lambda i: (0, i)),
    )

    cost = pl.CostEstimate(
        flops=8 * D * H * b_pad,
        transcendentals=2 * H * b_pad + D * b_pad,
        bytes_accessed=4 * (2 * b_pad * D + 4 * H * D + 2 * H + D),
    )

    outT = pl.pallas_call(
        kernel,
        out_shape=jax.ShapeDtypeStruct((D, b_pad), jnp.float32),
        grid_spec=grid_spec,
        compiler_params=pltpu.CompilerParams(
            dimension_semantics=("parallel",),
            vmem_limit_bytes=32 * 1024 * 1024,
        ),
        cost_estimate=cost,
    )(xT, maskT, w1, b1, w2s, w2t)

    return outT[:, :B].T                                        # back to (B, D)


coupling_layer_forward = jax.jit(_coupling_layer_forward,
                                 static_argnames=("mode", "block_b"))


def make_params(key, num_inputs, num_hidden, sigma=0.45):
    """Deterministic synthetic parameters matching RFFN(__init__) shapes."""
    ks = jax.random.split(key, 6)
    scale_coeff = jax.random.normal(ks[0], (num_hidden, num_inputs)) / sigma
    scale_offset = 2.0 * jnp.pi * jax.random.uniform(ks[1], (1, num_hidden))
    # PyTorch __init__ zeroes these; small random values for a non-trivial test.
    scale_out = 0.05 * jax.random.normal(ks[2], (num_inputs, num_hidden))
    trans_coeff = jax.random.normal(ks[3], (num_hidden, num_inputs)) / sigma
    trans_offset = 2.0 * jnp.pi * jax.random.uniform(ks[4], (1, num_hidden))
    trans_out = 0.05 * jax.random.normal(ks[5], (num_inputs, num_hidden))
    return dict(
        scale_coeff=scale_coeff.astype(jnp.float32),
        scale_offset=scale_offset.astype(jnp.float32),
        scale_out=scale_out.astype(jnp.float32),
        trans_coeff=trans_coeff.astype(jnp.float32),
        trans_offset=trans_offset.astype(jnp.float32),
        trans_out=trans_out.astype(jnp.float32),
    )


def coupling_layer_reference(x, mask, params, mode="direct"):
    """Pure-JAX reference mirroring the PyTorch forward for verification."""
    mask = mask.reshape(1, -1)
    masked = x * mask
    hs = jnp.cos(masked @ params["scale_coeff"].T + params["scale_offset"])
    log_s = (hs @ params["scale_out"].T) * (1.0 - mask)
    ht = jnp.cos(masked @ params["trans_coeff"].T + params["trans_offset"])
    t = (ht @ params["trans_out"].T) * (1.0 - mask)
    if mode == "direct":
        return x * jnp.exp(log_s) + t
    return (x - t) * jnp.exp(-log_s)


if __name__ == "__main__":
    B, D, H = 256, 4, 32          # batch, num_inputs, num_hidden (nfeat)
    key = jax.random.PRNGKey(0)
    kx, kp = jax.random.split(key)

    x = jax.random.normal(kx, (B, D), dtype=jnp.float32)
    mask = jnp.array([1.0, 0.0, 1.0, 0.0], dtype=jnp.float32)  # RealNVP mask
    params = make_params(kp, D, H, sigma=0.45)

    # block_b=128 -> grid=(2,) so the batch pipeline is actually exercised.
    out_direct = coupling_layer_forward(x, mask, params, mode="direct",
                                        block_b=128)
    out_inverse = coupling_layer_forward(x, mask, params, mode="inverse",
                                         block_b=128)
    jax.block_until_ready((out_direct, out_inverse))

    ref_direct = coupling_layer_reference(x, mask, params, mode="direct")
    ref_inverse = coupling_layer_reference(x, mask, params, mode="inverse")

    assert jnp.allclose(out_direct, ref_direct, atol=1e-5, rtol=1e-5)
    assert jnp.allclose(out_inverse, ref_inverse, atol=1e-5, rtol=1e-5)

    print("KERNEL_OK")
</pallas_src>

<mosaic_0001>
module attributes {stable_mosaic.version = 11 : i64} {
  func.func @coupling_kernel(%arg0: i32, %arg1: memref<4x128xf32, #tpu.memory_space<vmem>>, %arg2: memref<4x1xf32, #tpu.memory_space<vmem>>, %arg3: memref<64x4xf32, #tpu.memory_space<vmem>>, %arg4: memref<64x1xf32, #tpu.memory_space<vmem>>, %arg5: memref<4x32xf32, #tpu.memory_space<vmem>>, %arg6: memref<4x32xf32, #tpu.memory_space<vmem>>, %arg7: memref<4x128xf32, #tpu.memory_space<vmem>>) attributes {dimension_semantics = [#tpu.dimension_semantics<parallel>], iteration_bounds = array<i64: 2>, scalar_prefetch = 0 : i64, scratch_operands = 0 : i64, tpu.core_type = #tpu.core_type<tc>, window_params = [{transform_indices = @transform_0, window_bounds = array<i64: 4, 128>}, {pipeline_mode = #tpu.pipeline_mode<synchronous>, transform_indices = @transform_1, window_bounds = array<i64: 4, 1>}, {pipeline_mode = #tpu.pipeline_mode<synchronous>, transform_indices = @transform_2, window_bounds = array<i64: 64, 4>}, {pipeline_mode = #tpu.pipeline_mode<synchronous>, transform_indices = @transform_3, window_bounds = array<i64: 64, 1>}, {pipeline_mode = #tpu.pipeline_mode<synchronous>, transform_indices = @transform_4, window_bounds = array<i64: 4, 32>}, {pipeline_mode = #tpu.pipeline_mode<synchronous>, transform_indices = @transform_5, window_bounds = array<i64: 4, 32>}, {transform_indices = @transform_6, window_bounds = array<i64: 4, 128>}]} {
    %c0 = arith.constant 0 : index
    %c0_0 = arith.constant 0 : index
    %0 = vector.load %arg1[%c0, %c0_0] : memref<4x128xf32, #tpu.memory_space<vmem>>, vector<4x128xf32>
    %c0_1 = arith.constant 0 : index
    %c0_2 = arith.constant 0 : index
    %1 = vector.load %arg2[%c0_1, %c0_2] : memref<4x1xf32, #tpu.memory_space<vmem>>, vector<4x1xf32>
    %cst = arith.constant 1.000000e+00 : f32
    %2 = vector.broadcast %cst : f32 to vector<4x1xf32>
    %3 = arith.subf %2, %1 : vector<4x1xf32>
    %4 = vector.shape_cast %3 : vector<4x1xf32> to vector<4x1xf32>
    %5 = vector.broadcast %4 : vector<4x1xf32> to vector<4x128xf32>
    %6 = vector.broadcast %1 : vector<4x1xf32> to vector<4x128xf32>
    %7 = arith.mulf %0, %6 : vector<4x128xf32>
    %c0_3 = arith.constant 0 : index
    %c0_4 = arith.constant 0 : index
    %8 = vector.load %arg3[%c0_3, %c0_4] : memref<64x4xf32, #tpu.memory_space<vmem>>, vector<64x4xf32>
    %cst_5 = arith.constant dense<0.000000e+00> : vector<64x128xf32>
    %9 = tpu.matmul %8, %7, %cst_5 {dimension_numbers = #tpu.dot_dimension_numbers<[1], [0], [0], [1], [0, 0, 1, 1], [], []>} : vector<64x4xf32>, vector<4x128xf32>, vector<64x128xf32> -> vector<64x128xf32>
    %c0_6 = arith.constant 0 : index
    %c0_7 = arith.constant 0 : index
    %10 = vector.load %arg4[%c0_6, %c0_7] : memref<64x1xf32, #tpu.memory_space<vmem>>, vector<64x1xf32>
    %11 = vector.broadcast %10 : vector<64x1xf32> to vector<64x128xf32>
    %12 = arith.addf %9, %11 : vector<64x128xf32>
    %13 = math.cos %12 : vector<64x128xf32>
    %14 = vector.extract_strided_slice %13 {offsets = [0, 0], sizes = [32, 128], strides = [1, 1]} : vector<64x128xf32> to vector<32x128xf32>
    %15 = vector.extract_strided_slice %13 {offsets = [32, 0], sizes = [32, 128], strides = [1, 1]} : vector<64x128xf32> to vector<32x128xf32>
    %c0_8 = arith.constant 0 : index
    %c0_9 = arith.constant 0 : index
    %16 = vector.load %arg5[%c0_8, %c0_9] : memref<4x32xf32, #tpu.memory_space<vmem>>, vector<4x32xf32>
    %cst_10 = arith.constant dense<0.000000e+00> : vector<4x128xf32>
    %17 = tpu.matmul %16, %14, %cst_10 {dimension_numbers = #tpu.dot_dimension_numbers<[1], [0], [0], [1], [0, 0, 1, 1], [], []>} : vector<4x32xf32>, vector<32x128xf32>, vector<4x128xf32> -> vector<4x128xf32>
    %18 = arith.mulf %17, %5 : vector<4x128xf32>
    %c0_11 = arith.constant 0 : index
    %c0_12 = arith.constant 0 : index
    %19 = vector.load %arg6[%c0_11, %c0_12] : memref<4x32xf32, #tpu.memory_space<vmem>>, vector<4x32xf32>
    %cst_13 = arith.constant dense<0.000000e+00> : vector<4x128xf32>
    %20 = tpu.matmul %19, %15, %cst_13 {dimension_numbers = #tpu.dot_dimension_numbers<[1], [0], [0], [1], [0, 0, 1, 1], [], []>} : vector<4x32xf32>, vector<32x128xf32>, vector<4x128xf32> -> vector<4x128xf32>
    %21 = arith.mulf %20, %5 : vector<4x128xf32>
    %22 = math.exp %18 : vector<4x128xf32>
    %23 = arith.mulf %0, %22 : vector<4x128xf32>
    %24 = arith.addf %23, %21 : vector<4x128xf32>
    %c0_14 = arith.constant 0 : index
    %c0_15 = arith.constant 0 : index
    %25 = vector.load %arg7[%c0_14, %c0_15] : memref<4x128xf32, #tpu.memory_space<vmem>>, vector<4x128xf32>
    tpu.vector_store %arg7[%c0_14, %c0_15], %24 {strides = array<i32>} : memref<4x128xf32, #tpu.memory_space<vmem>>, vector<4x128xf32>,
    return
  }
  func.func @transform_0(%arg0: i32) -> (i32, i32) {
    %c0_i32 = arith.constant 0 : i32
    %c0_i32_0 = arith.constant 0 : i32
    return %c0_i32, %arg0 : i32, i32
  }
  func.func @transform_1(%arg0: i32) -> (i32, i32) {
    %c0_i32 = arith.constant 0 : i32
    %c0_i32_0 = arith.constant 0 : i32
    %c0_i32_1 = arith.constant 0 : i32
    return %c0_i32, %c0_i32_0 : i32, i32
  }
  func.func @transform_2(%arg0: i32) -> (i32, i32) {
    %c0_i32 = arith.constant 0 : i32
    %c0_i32_0 = arith.constant 0 : i32
    %c0_i32_1 = arith.constant 0 : i32
    return %c0_i32, %c0_i32_0 : i32, i32
  }
  func.func @transform_3(%arg0: i32) -> (i32, i32) {
    %c0_i32 = arith.constant 0 : i32
    %c0_i32_0 = arith.constant 0 : i32
    %c0_i32_1 = arith.constant 0 : i32
    return %c0_i32, %c0_i32_0 : i32, i32
  }
  func.func @transform_4(%arg0: i32) -> (i32, i32) {
    %c0_i32 = arith.constant 0 : i32
    %c0_i32_0 = arith.constant 0 : i32
    %c0_i32_1 = arith.constant 0 : i32
    return %c0_i32, %c0_i32_0 : i32, i32
  }
  func.func @transform_5(%arg0: i32) -> (i32, i32) {
    %c0_i32 = arith.constant 0 : i32
    %c0_i32_0 = arith.constant 0 : i32
    %c0_i32_1 = arith.constant 0 : i32
    return %c0_i32, %c0_i32_0 : i32, i32
  }
  func.func @transform_6(%arg0: i32) -> (i32, i32) {
    %c0_i32 = arith.constant 0 : i32
    %c0_i32_0 = arith.constant 0 : i32
    return %c0_i32, %arg0 : i32, i32
  }
}

</mosaic_0001>

<llo_original>
// kernel: _coupling_layer_forward.1
$region0: #{_coupling_layer_forward.1}
  #allocation0 [shape = 'u32[]', space=smem, size = 0x4, offset = 0x4, fixed_abs, tag = 'smem constant byte address 0x4 - core index']
  #allocation1 [shape = 'u32[144,128]{1,0:T(1,128)}', space=vmem, size = 0x12000, scoped, tag = 'internal scratch']
  %s0 = inlined_call_operand.vmem [shape: f32[4,256], index: 0, kind: input, shape index: {}]
  %s1 = inlined_call_operand.vmem [shape: f32[4,1], index: 1, kind: input, shape index: {}]
  %s2 = inlined_call_operand.vmem [shape: f32[64,4], index: 2, kind: input, shape index: {}]
  %s3 = inlined_call_operand.vmem [shape: f32[64,1], index: 3, kind: input, shape index: {}]
  %s4 = inlined_call_operand.vmem [shape: f32[4,32], index: 4, kind: input, shape index: {}]
  %s5 = inlined_call_operand.vmem [shape: f32[4,32], index: 5, kind: input, shape index: {}]
  %s6 = inlined_call_operand.hbm [shape: f32[4,256], index: 6, kind: output, shape index: {}]
  %s7 = sld [smem:[#allocation0]]
  $region57: #{_coupling_layer_forward.1} parent=0
    _
  %s9 = ssub.s32 1, %s7
  %s10 = scalar_select 0, %s9, %s7
  $region1: #{_coupling_layer_forward.1} parent=0
    #allocation2 [shape = 'u8[4096]{0}', space=vmem, size = 0x1000, scoped, tag = 'output window, operand 0']
    #allocation3 [shape = 's32[2]{0}', space=sflag, size = 0x8, scoped, tag = 'scoped memory for _coupling_layer_forward.1']
    %11 = vsyncpa [#allocation3], 0
    %s12 = scalar_lea.sflag [#allocation3], 1
    %13 = vsyncpa %s12, 0
    loop: start=0, step=1, limit=4
    $region2: #{_coupling_layer_forward.1} parent=1 // loop_pre_header
      _
    $region3: #{_coupling_layer_forward.1} parent=1 // loop_header
      %s15 = sphi 0, %s19
      %p16 = scmp.ge.s32.totalorder %s15, 4
      %s25 = sphi 0, %s27
      %s28 = sphi 0, %s25
      %s29 = sphi 0, %s28
      %s45 = sphi 0, %s29
      %s49 = sphi 0, %s49
      %s51 = sphi 0, %s49
      %s52 = sphi 0, %s51
      %s66 = sphi 0, %s52
      %s70 = sphi 0, %s70
      %s72 = sphi 0, %s70
      %s73 = sphi 0, %s72
      %s87 = sphi 0, %s73
      %s91 = sphi 0, %s91
      %s93 = sphi 0, %s91
      %s94 = sphi 0, %s93
      %s108 = sphi 0, %s94
      %s112 = sphi 0, %s112
      %s114 = sphi 0, %s112
      %s115 = sphi 0, %s114
      %s129 = sphi 0, %s115
      %s133 = sphi 0, %s133
      %s135 = sphi 0, %s133
      %s136 = sphi 0, %s135
      %s150 = sphi 0, %s136
      %s156 = sphi 0, %s158
      %s159 = sphi 0, %s156
      %s160 = sphi 0, %s159
      %s176 = sphi 0, %s160
    $region4: #{_coupling_layer_forward.1} parent=1 // loop_header_branch
      %18 = sbr.rel (%p16) target = $region8
    $region5: #{_coupling_layer_forward.1} parent=1 // loop_body
      %s20 = ssub.s32 %s15, 1
      %s21 = ssub.s32 %s15, 2
      %s22 = sadd.s32 %s15, 1
      %s23 = ssub.s32 %s15, %s22
      %p24 = scmp.eq.s32.totalorder %s23, 0
      %s26 = sadd.s32 %s25, 1
      %s27 = scalar_select %p24, %s25, %s26
      %p30 = pneg %p24
      %p31 = scmp.eq.s32.totalorder %s15, 1
      %p32 = por %p30, %p31
      %p33 = scmp.ne.s32.totalorder %s25, %s28
      %p34 = scmp.eq.s32.totalorder %s15, 0
      %p35 = por %p33, %p34
      %p36 = scmp.ne.s32.totalorder %s25, %s28
      %p37 = scmp.eq.s32.totalorder %s20, 1
      %p38 = por %p36, %p37
      %p39 = scmp.ne.s32.totalorder %s28, %s29
      %p40 = scmp.eq.s32.totalorder %s20, 0
      %p41 = por %p39, %p40
      %p42 = scmp.ne.s32.totalorder %s28, %s29
      %p43 = scmp.eq.s32.totalorder %s21, 1
      %p44 = por %p42, %p43
      %p46 = scmp.ne.s32.totalorder %s29, %s45
      %p47 = scmp.eq.s32.totalorder %s21, 0
      %p48 = por %p46, %p47
      %s50 = sadd.s32 %s49, 1
      %p53 = scmp.eq.s32.totalorder %s15, 1
      %p54 = scmp.ne.s32.totalorder %s49, %s51
      %p55 = scmp.eq.s32.totalorder %s15, 0
      %p56 = por %p54, %p55
      %p57 = scmp.ne.s32.totalorder %s49, %s51
      %p58 = scmp.eq.s32.totalorder %s20, 1
      %p59 = por %p57, %p58
      %p60 = scmp.ne.s32.totalorder %s51, %s52
      %p61 = scmp.eq.s32.totalorder %s20, 0
      %p62 = por %p60, %p61
      %p63 = scmp.ne.s32.totalorder %s51, %s52
      %p64 = scmp.eq.s32.totalorder %s21, 1
      %p65 = por %p63, %p64
      %p67 = scmp.ne.s32.totalorder %s52, %s66
      %p68 = scmp.eq.s32.totalorder %s21, 0
      %p69 = por %p67, %p68
      %s71 = sadd.s32 %s70, 1
      %p74 = scmp.eq.s32.totalorder %s15, 1
      %p75 = scmp.ne.s32.totalorder %s70, %s72
      %p76 = scmp.eq.s32.totalorder %s15, 0
      %p77 = por %p75, %p76
      %p78 = scmp.ne.s32.totalorder %s70, %s72
      %p79 = scmp.eq.s32.totalorder %s20, 1
      %p80 = por %p78, %p79
      %p81 = scmp.ne.s32.totalorder %s72, %s73
      %p82 = scmp.eq.s32.totalorder %s20, 0
      %p83 = por %p81, %p82
      %p84 = scmp.ne.s32.totalorder %s72, %s73
      %p85 = scmp.eq.s32.totalorder %s21, 1
      %p86 = por %p84, %p85
      %p88 = scmp.ne.s32.totalorder %s73, %s87
      %p89 = scmp.eq.s32.totalorder %s21, 0
      %p90 = por %p88, %p89
      %s92 = sadd.s32 %s91, 1
      %p95 = scmp.eq.s32.totalorder %s15, 1
      %p96 = scmp.ne.s32.totalorder %s91, %s93
      %p97 = scmp.eq.s32.totalorder %s15, 0
      %p98 = por %p96, %p97
      %p99 = scmp.ne.s32.totalorder %s91, %s93
      %p100 = scmp.eq.s32.totalorder %s20, 1
      %p101 = por %p99, %p100
      %p102 = scmp.ne.s32.totalorder %s93, %s94
      %p103 = scmp.eq.s32.totalorder %s20, 0
      %p104 = por %p102, %p103
      %p105 = scmp.ne.s32.totalorder %s93, %s94
      %p106 = scmp.eq.s32.totalorder %s21, 1
      %p107 = por %p105, %p106
      %p109 = scmp.ne.s32.totalorder %s94, %s108
      %p110 = scmp.eq.s32.totalorder %s21, 0
      %p111 = por %p109, %p110
      %s113 = sadd.s32 %s112, 1
      %p116 = scmp.eq.s32.totalorder %s15, 1
      %p117 = scmp.ne.s32.totalorder %s112, %s114
      %p118 = scmp.eq.s32.totalorder %s15, 0
      %p119 = por %p117, %p118
      %p120 = scmp.ne.s32.totalorder %s112, %s114
      %p121 = scmp.eq.s32.totalorder %s20, 1
      %p122 = por %p120, %p121
      %p123 = scmp.ne.s32.totalorder %s114, %s115
      %p124 = scmp.eq.s32.totalorder %s20, 0
      %p125 = por %p123, %p124
      %p126 = scmp.ne.s32.totalorder %s114, %s115
      %p127 = scmp.eq.s32.totalorder %s21, 1
      %p128 = por %p126, %p127
      %p130 = scmp.ne.s32.totalorder %s115, %s129
      %p131 = scmp.eq.s32.totalorder %s21, 0
      %p132 = por %p130, %p131
      %s134 = sadd.s32 %s133, 1
      %p137 = scmp.eq.s32.totalorder %s15, 1
      %p138 = scmp.ne.s32.totalorder %s133, %s135
      %p139 = scmp.eq.s32.totalorder %s15, 0
      %p140 = por %p138, %p139
      %p141 = scmp.ne.s32.totalorder %s133, %s135
      %p142 = scmp.eq.s32.totalorder %s20, 1
      %p143 = por %p141, %p142
      %p144 = scmp.ne.s32.totalorder %s135, %s136
      %p145 = scmp.eq.s32.totalorder %s20, 0
      %p146 = por %p144, %p145
      %p147 = scmp.ne.s32.totalorder %s135, %s136
      %p148 = scmp.eq.s32.totalorder %s21, 1
      %p149 = por %p147, %p148
      %p151 = scmp.ne.s32.totalorder %s136, %s150
      %p152 = scmp.eq.s32.totalorder %s21, 0
      %p153 = por %p151, %p152
      %s154 = ssub.s32 %s15, %s22
      %p155 = scmp.eq.s32.totalorder %s154, 0
      %s157 = sadd.s32 %s156, 1
      %s158 = scalar_select %p155, %s156, %s157
      %p161 = pneg %p155
      %p162 = scmp.eq.s32.totalorder %s15, 1
      %p163 = por %p161, %p162
      %p164 = scmp.ne.s32.totalorder %s156, %s159
      %p165 = scmp.eq.s32.totalorder %s15, 0
      %p166 = por %p164, %p165
      %p167 = scmp.ne.s32.totalorder %s156, %s159
      %p168 = scmp.eq.s32.totalorder %s20, 1
      %p169 = por %p167, %p168
      %p170 = scmp.ne.s32.totalorder %s159, %s160
      %p171 = scmp.eq.s32.totalorder %s20, 0
      %p172 = por %p170, %p171
      %p173 = scmp.ne.s32.totalorder %s159, %s160
      %p174 = scmp.eq.s32.totalorder %s21, 1
      %p175 = por %p173, %p174
      %p177 = scmp.ne.s32.totalorder %s160, %s176
      %p178 = scmp.eq.s32.totalorder %s21, 0
      %p179 = por %p177, %p178
      %p180 = scmp.le.s32.totalorder 1, %s15
      %p181 = scmp.lt.s32.totalorder %s15, 3
      %p182 = pnand %p180, %p181
      %p183 = pneg %p182
      // Predicated region
      $region9: #{_coupling_layer_forward.1} parent=5 // pred_check
        _
      $region10: #{_coupling_layer_forward.1} parent=5 // pred_check_branch
        %185 = sbr.rel (%p182) target = $region12
      $region11: #{_coupling_layer_forward.1} parent=5 // pred_region
        %s186 = ssub.s32 %s15, 1
        // Predicated region
        $region13: #{_coupling_layer_forward.1} parent=11 // pred_check
          %p187 = pneg %p62
        $region14: #{_coupling_layer_forward.1} parent=11 // pred_check_branch
          %189 = sbr.rel (%p187) target = $region16
        $region15: #{_coupling_layer_forward.1} parent=11 // pred_region
          _
        $region16: #{_coupling_layer_forward.1} parent=11 // pred_fallthru
          _
        // Predicated region
        $region17: #{_coupling_layer_forward.1} parent=11 // pred_check
          %p190 = pneg %p83
        $region18: #{_coupling_layer_forward.1} parent=11 // pred_check_branch
          %192 = sbr.rel (%p190) target = $region20
        $region19: #{_coupling_layer_forward.1} parent=11 // pred_region
          _
        $region20: #{_coupling_layer_forward.1} parent=11 // pred_fallthru
          _
        // Predicated region
        $region21: #{_coupling_layer_forward.1} parent=11 // pred_check
          %p193 = pneg %p104
        $region22: #{_coupling_layer_forward.1} parent=11 // pred_check_branch
          %195 = sbr.rel (%p193) target = $region24
        $region23: #{_coupling_layer_forward.1} parent=11 // pred_region
          _
        $region24: #{_coupling_layer_forward.1} parent=11 // pred_fallthru
          _
        // Predicated region
        $region25: #{_coupling_layer_forward.1} parent=11 // pred_check
          %p196 = pneg %p125
        $region26: #{_coupling_layer_forward.1} parent=11 // pred_check_branch
          %198 = sbr.rel (%p196) target = $region28
        $region27: #{_coupling_layer_forward.1} parent=11 // pred_region
          _
        $region28: #{_coupling_layer_forward.1} parent=11 // pred_fallthru
          _
        // Predicated region
        $region29: #{_coupling_layer_forward.1} parent=11 // pred_check
          %p199 = pneg %p146
        $region30: #{_coupling_layer_forward.1} parent=11 // pred_check_branch
          %201 = sbr.rel (%p199) target = $region32
        $region31: #{_coupling_layer_forward.1} parent=11 // pred_region
          _
        $region32: #{_coupling_layer_forward.1} parent=11 // pred_fallthru
          _
      $region12: #{_coupling_layer_forward.1} parent=5 // pred_fallthru
        _
      %p202 = scmp.lt.s32.totalorder %s15, 2
      // Predicated region
      $region33: #{_coupling_layer_forward.1} parent=5 // pred_check
        %p203 = pneg %p202
      $region34: #{_coupling_layer_forward.1} parent=5 // pred_check_branch
        %205 = sbr.rel (%p203) target = $region36
      $region35: #{_coupling_layer_forward.1} parent=5 // pred_region
        // Predicated region
        $region37: #{_coupling_layer_forward.1} parent=35 // pred_check
          %p206 = pneg %p35
        $region38: #{_coupling_layer_forward.1} parent=35 // pred_check_branch
          %208 = sbr.rel (%p206) target = $region40
        $region39: #{_coupling_layer_forward.1} parent=35 // pred_region
          %p209 = scmp.lt.s32.totalorder %s15, 1
          %s210 = scalar_select %p209, %s15, 1
          %s211 = smul.addr %s210, 4
          %s212 = scalar_lea.vmem %s0, %s211
        $region40: #{_coupling_layer_forward.1} parent=35 // pred_fallthru
          _
      $region36: #{_coupling_layer_forward.1} parent=5 // pred_fallthru
        _
      %p213 = scmp.le.s32.totalorder 1, %s15
      %p214 = scmp.lt.s32.totalorder %s15, 3
      %p215 = pnand %p213, %p214
      %p216 = pneg %p215
      // Predicated region
      $region41: #{_coupling_layer_forward.1} parent=5 // pred_check
        _
      $region42: #{_coupling_layer_forward.1} parent=5 // pred_check_branch
        %218 = sbr.rel (%p215) target = $region44
      $region43: #{_coupling_layer_forward.1} parent=5 // pred_region
        %s219 = ssub.s32 %s15, 1
        %p220 = scmp.lt.s32.totalorder %s20, 1
        %s221 = scalar_select %p220, %s20, 1
        %s222 = smul.addr %s221, 4
        %s223 = scalar_lea.vmem %s0, %s222
        %p224 = pneg %p41
        %p225 = pneg %p38
        %p226 = pneg %p62
        %p227 = pneg %p59
        %p228 = pneg %p83
        %p229 = pneg %p80
        %p230 = pneg %p104
        %p231 = pneg %p101
        %p232 = pneg %p125
        %p233 = pneg %p122
        %p234 = pneg %p146
        %p235 = pneg %p143
        %p236 = pneg %p172
        %p237 = pneg %p169
        %s238 = sand.u32 %s159, 1
        %s239 = scalar_lea.sflag [#allocation3], %s238
        %s240 = sand.u32 %s159, 1
        %s241 = smul.addr %s240, 4
        %s242 = scalar_lea.vmem [#allocation2], %s241
        %p243 = scmp.lt.s32.totalorder %s20, 1
        %s244 = scalar_select %p243, %s20, 1
        %s245 = smul.addr %s244, 4
        %s246 = scalar_lea.vmem %s0, %s245
        %v247 = vld [vmem:[%s246] sm:$0xf]
        %v248 = vld [vmem:[%s1] sm:$0xf]
        %v249 = vsub.f32 1.0, %v248
        %251 = vset.pattern.permute.xlu0 0
        %252 = vperm.xlu0 %251, %v249
        %v253 = vpop.permute.xlu0 %252
        %256 = vset.pattern.permute.xlu0 0
        %257 = vperm.xlu0 %256, %v248
        %v258 = vpop.permute.xlu0 %257
        %v260 = vmul.f32 %v247, %v258
        %v261 = vld [vmem:[%s2] sm:$0xff]
        %v262 = vld [vmem:[%s2 + $0x8] sm:$0xff]
        %v263 = vld [vmem:[%s2 + $0x10] sm:$0xff]
        %v264 = vld [vmem:[%s2 + $0x18] sm:$0xff]
        %v265 = vld [vmem:[%s2 + $0x20] sm:$0xff]
        %v266 = vld [vmem:[%s2 + $0x28] sm:$0xff]
        %v267 = vld [vmem:[%s2 + $0x30] sm:$0xff]
        %v268 = vld [vmem:[%s2 + $0x38] sm:$0xff]
        %v269 = vld [vmem:[%s3] sm:$0xff]
        %v270 = vld [vmem:[%s3 + $0x8] sm:$0xff]
        %v271 = vld [vmem:[%s3 + $0x10] sm:$0xff]
        %v272 = vld [vmem:[%s3 + $0x18] sm:$0xff]
        %v273 = vld [vmem:[%s3 + $0x20] sm:$0xff]
        %v274 = vld [vmem:[%s3 + $0x28] sm:$0xff]
        %v275 = vld [vmem:[%s3 + $0x30] sm:$0xff]
        %v276 = vld [vmem:[%s3 + $0x38] sm:$0xff]
        %278 = vset.pattern.permute.xlu0 0
        %279 = vperm.xlu0 %278, %v269
        %v280 = vpop.permute.xlu0 %279
        %283 = vset.pattern.permute.xlu0 0
        %284 = vperm.xlu0 %283, %v270
        %v285 = vpop.permute.xlu0 %284
        %288 = vset.pattern.permute.xlu0 0
        %289 = vperm.xlu0 %288, %v271
        %v290 = vpop.permute.xlu0 %289
        %293 = vset.pattern.permute.xlu0 0
        %294 = vperm.xlu0 %293, %v272
        %v295 = vpop.permute.xlu0 %294
        %298 = vset.pattern.permute.xlu0 0
        %299 = vperm.xlu0 %298, %v273
        %v300 = vpop.permute.xlu0 %299
        %303 = vset.pattern.permute.xlu0 0
        %304 = vperm.xlu0 %303, %v274
        %v305 = vpop.permute.xlu0 %304
        %308 = vset.pattern.permute.xlu0 0
        %309 = vperm.xlu0 %308, %v275
        %v310 = vpop.permute.xlu0 %309
        %313 = vset.pattern.permute.xlu0 0
        %314 = vperm.xlu0 %313, %v276
        %v315 = vpop.permute.xlu0 %314
        %vm317 = vcmask 31744
        %v319 = vsel %vm317, %v261, 0
        %v322 = vsel %vm317, %v262, 0
        %v325 = vsel %vm317, %v263, 0
        %v328 = vsel %vm317, %v264, 0
        %v331 = vsel %vm317, %v265, 0
        %v334 = vsel %vm317, %v266, 0
        %v337 = vsel %vm317, %v267, 0
        %v340 = vsel %vm317, %v268, 0
        %vm342 = vcmask 1043456
        %v344 = vsel %vm342, %v260, 0
        %346 = vmatprep.subr.mxu0 0.0
        %347 = vmatpush1.msra.mxu0 %v344
        %348 = vmatprep.subr.mxu0 0.0
        %349 = vmatpush1.msra.mxu0 0.0
        %350 = vmatprep.subr.mxu0 0.0
        %351 = vmatpush1.msra.mxu0 0.0
        %352 = vmatprep.subr.mxu0 0.0
        %353 = vmatpush1.msra.mxu0 0.0
        %354 = vmatprep.subr.mxu0 0.0
        %355 = vmatpush1.msra.mxu0 0.0
        %356 = vmatprep.subr.mxu0 0.0
        %357 = vmatpush1.msra.mxu0 0.0
        %358 = vmatprep.subr.mxu0 0.0
        %359 = vmatpush1.msra.mxu0 0.0
        %360 = vmatprep.subr.mxu0 0.0
        %361 = vmatpush1.msra.mxu0 0.0
        %362 = vmatprep.subr.mxu0 0.0
        %363 = vmatpush1.msra.mxu0 0.0
        %364 = vmatprep.subr.mxu0 0.0
        %365 = vmatpush1.msra.mxu0 0.0
        %366 = vmatprep.subr.mxu0 0.0
        %367 = vmatpush1.msra.mxu0 0.0
        %368 = vmatprep.subr.mxu0 0.0
        %369 = vmatpush1.msra.mxu0 0.0
        %370 = vmatprep.subr.mxu0 0.0
        %371 = vmatpush1.msra.mxu0 0.0
        %372 = vmatprep.subr.mxu0 0.0
        %373 = vmatpush1.msra.mxu0 0.0
        %374 = vmatprep.subr.mxu0 0.0
        %375 = vmatpush1.msra.mxu0 0.0
        %376 = vmatprep.subr.mxu0 0.0
        %377 = vmatpush1.msra.mxu0 0.0
        %378 = vmatprep.subr.mxu0 0.0
        %379 = vmatpush1.msra.mxu0 0.0
        %380 = vmatprep.subr.mxu0 0.0
        %381 = vmatpush1.msra.mxu0 0.0
        %382 = vmatprep.subr.mxu0 0.0
        %383 = vmatpush1.msra.mxu0 0.0
        %384 = vmatprep.subr.mxu0 0.0
        %385 = vmatpush1.msra.mxu0 0.0
        %386 = vmatprep.subr.mxu0 0.0
        %387 = vmatpush1.msra.mxu0 0.0
        %388 = vmatprep.subr.mxu0 0.0
        %389 = vmatpush1.msra.mxu0 0.0
        %390 = vmatprep.subr.mxu0 0.0
        %391 = vmatpush1.msra.mxu0 0.0
        %392 = vmatprep.subr.mxu0 0.0
        %393 = vmatpush1.msra.mxu0 0.0
        %394 = vmatprep.subr.mxu0 0.0
        %395 = vmatpush1.msra.mxu0 0.0
        %396 = vmatprep.subr.mxu0 0.0
        %397 = vmatpush1.msra.mxu0 0.0
        %398 = vmatprep.subr.mxu0 0.0
        %399 = vmatpush1.msra.mxu0 0.0
        %400 = vmatprep.subr.mxu0 0.0
        %401 = vmatpush1.msra.mxu0 0.0
        %402 = vmatprep.subr.mxu0 0.0
        %403 = vmatpush1.msra.mxu0 0.0
        %404 = vmatprep.subr.mxu0 0.0
        %405 = vmatpush1.msra.mxu0 0.0
        %406 = vmatprep.subr.mxu0 0.0
        %407 = vmatpush1.msra.mxu0 0.0
        %408 = vmatprep.subr.mxu0 0.0
        %409 = vmatpush1.msra.mxu0 0.0
        %410 = vmatprep.mubr.f32.mxu0 0.0
        %411 = vmatmul.mubr.f32.gmra.mrb[0].mxu0 %v319
        %v412 = vpop.f32.mrb[0].mxu0
        %v413 = vadd.f32 %v280, %v412
        %v414 = vpop.f32.mrb[0].mxu0
        %415 = vmatprep.mubr.f32.mxu0 0.0
        %416 = vmatmul.mubr.f32.gmra.mrb[0].mxu0 %v322
        %v417 = vpop.f32.mrb[0].mxu0
        %v418 = vadd.f32 %v285, %v417
        %v419 = vpop.f32.mrb[0].mxu0
        %420 = vmatprep.mubr.f32.mxu0 0.0
        %421 = vmatmul.mubr.f32.gmra.mrb[0].mxu0 %v325
        %v422 = vpop.f32.mrb[0].mxu0
        %v423 = vadd.f32 %v290, %v422
        %v424 = vpop.f32.mrb[0].mxu0
        %425 = vmatprep.mubr.f32.mxu0 0.0
        %426 = vmatmul.mubr.f32.gmra.mrb[0].mxu0 %v328
        %v427 = vpop.f32.mrb[0].mxu0
        %v428 = vadd.f32 %v295, %v427
        %v429 = vpop.f32.mrb[0].mxu0
        %430 = vmatprep.mubr.f32.mxu0 0.0
        %431 = vmatmul.mubr.f32.gmra.mrb[0].mxu0 %v331
        %v432 = vpop.f32.mrb[0].mxu0
        %v433 = vadd.f32 %v300, %v432
        %v434 = vpop.f32.mrb[0].mxu0
        %435 = vmatprep.mubr.f32.mxu0 0.0
        %436 = vmatmul.mubr.f32.gmra.mrb[0].mxu0 %v334
        %v437 = vpop.f32.mrb[0].mxu0
        %v438 = vadd.f32 %v305, %v437
        %v439 = vpop.f32.mrb[0].mxu0
        %440 = vmatprep.mubr.f32.mxu0 0.0
        %441 = vmatmul.mubr.f32.gmra.mrb[0].mxu0 %v337
        %v442 = vpop.f32.mrb[0].mxu0
        %v443 = vadd.f32 %v310, %v442
        %v444 = vpop.f32.mrb[0].mxu0
        %445 = vmatprep.mubr.f32.mxu0 0.0
        %446 = vmatmul.mubr.f32.gmra.mrb[0].mxu0 %v340
        %v447 = vpop.f32.mrb[0].mxu0
        %v448 = vadd.f32 %v315, %v447
        %v449 = vpop.f32.mrb[0].mxu0
        %450 = vdwg.mxu0
        %v451 = vand.u32 2147483647, %v413
        %vm452 = vcmp.le.f32.partialorder %v451, 0.7853982
        %vm453 = vcmp.lt.s32.totalorder %v413, 0
        %v454 = vand.u32 %v413, 2139095040
        %v455 = vshrl.u32 %v454, 23
        %v456 = vsub.s32 %v455, 127
        %v457 = vand.u32 2147483647, %v413
        %v458 = vand.u32 %v457, 8388607
        %v459 = vor.u32 %v458, 8388608
        %v460 = vsub.s32 0, %v459
        %v461 = vadd.s32 %v456, 1
        %vm462 = vcmp.gt.s32.totalorder %v461, 0
        %v463 = vsel %vm462, %v461, 0
        %v464 = vshrl.u32 %v463, 5
        %v465 = vand.u32 %v463, 31
        %v466 = vsub.s32 32, %v465
        %v467 = vshrl.u32 683565275, %v466
        %v468 = vshll.u32 683565275, %v465
        %v469 = vshrl.u32 2475754826, %v466
        %v470 = vor.u32 %v468, %v469
        %v471 = vshll.u32 2475754826, %v465
        %v472 = vshrl.u32 2131351028, %v466
        %v473 = vor.u32 %v471, %v472
        %v474 = vshll.u32 2131351028, %v465
        %v475 = vshrl.u32 2102212464, %v466
        %v476 = vor.u32 %v474, %v475
        %v477 = vshll.u32 2102212464, %v465
        %v478 = vshrl.u32 920167782, %v466
        %v479 = vor.u32 %v477, %v478
        %v480 = vshll.u32 920167782, %v465
        %v481 = vshrl.u32 1326507024, %v466
        %v482 = vor.u32 %v480, %v481
        %vm483 = vcmp.lt.s32.totalorder %v464, 1
        %vm484 = vcmp.lt.s32.totalorder %v464, 2
        %vm485 = vcmp.lt.s32.totalorder %v464, 3
        %vm486 = vcmp.lt.s32.totalorder %v464, 4
        %v487 = vsel %vm483, %v467, %v470
        %v488 = vsel %vm486, %v476, 2102212464
        %v489 = vsel %vm485, %v473, %v488
        %v490 = vsel %vm484, %v487, %v489
        %v491 = vsel %vm483, %v470, %v473
        %v492 = vsel %vm486, %v479, 920167782
        %v493 = vsel %vm485, %v476, %v492
        %v494 = vsel %vm484, %v491, %v493
        %v495 = vsel %vm483, %v473, %v476
        %v496 = vsel %vm486, %v482, 1326507024
        %v497 = vsel %vm485, %v479, %v496
        %v498 = vsel %vm484, %v495, %v497
        %v499 = vshll.u32 %v459, 8
        %v500 = vmul.u32.u64.compose %v499, %v498
        %v501 = vextract.low.u32 %v500
        %v502 = vextract.high.u32 %v500
        %v503 = vmul.u32.u64.compose %v499, %v494
        %v504 = vextract.low.u32 %v503
        %v505 = vextract.high.u32 %v503
        %v506 = vmul.u32 %v499, %v490
        %v507 = vadd.s32 %v502, %v504
        %vm508 = vc.u32 %v502, %v504
        %v509 = vadd.s32 %v505, 1
        %v510 = vsel %vm508, %v509, %v505
        %v511 = vadd.s32 %v506, %v510
        %v512 = vadd.s32 %v511, 536870912
        %v513 = vshrl.u32 %v512, 30
        %v514 = vshll.u32 %v513, 30
        %v515 = vsub.s32 %v511, %v514
        %vm516 = vcmp.lt.s32.totalorder %v515, 0
        %v517 = vsub.s32 0, %v515
        %v518 = vsel %vm516, %v517, %v515
        %v519 = vclz %v518
        %v520 = vsub.s32 %v519, 2
        %vm521 = vcmp.gt.s32.totalorder 0, %v520
        %v522 = vsel %vm521, 0, %v520
        %v523 = vsub.s32 32, %v522
        %v524 = vshll.u32 %v515, %v522
        %v525 = vshrl.u32 %v507, %v523
        %v526 = vor.u32 %v524, %v525
        %v527 = vsub.s32 4294967266, %v522
        %v528 = vadd.s32 %v527, 127
        %v529 = vshll.u32 %v528, 23
        %v530 = vor.u32 4788187, %v529
        %v531 = vand.u32 2147483647, %v530
        %v533 = vcvt.s32.f32 %v526
        %v534 = vmul.f32 %v533, %v531
        %v535 = vxor.u32 %v534, 2147483648
        %v536 = vsel %vm453, %v535, %v534
        %v537 = vsub.s32 4, %v513
        %v538 = vsel %vm453, %v537, %v513
        %v539 = vsel %vm452, %v413, %v536
        %v540 = vsel %vm452, 0, %v538
        %v541 = vcosq.f32.pop %v539
        %v542 = vsinq.f32.pop %v539
        %vm543 = vweird.f32 %v413
        %v544 = vand.u32 %v540, 3
        %vm545 = vcmp.lt.s32.totalorder %v544, 2
        %vm546 = vcmp.eq.s32.totalorder %v544, 0
        %v547 = vxor.u32 %v542, 2147483648
        %v548 = vsel %vm546, %v541, %v547
        %vm549 = vcmp.eq.s32.totalorder %v544, 2
        %v550 = vxor.u32 %v541, 2147483648
        %v551 = vsel %vm549, %v550, %v542
        %v552 = vsel %vm545, %v548, %v551
        %v553 = vsel %vm543, nan, %v552
        %v554 = vand.u32 2147483647, %v418
        %vm555 = vcmp.le.f32.partialorder %v554, 0.7853982
        %vm556 = vcmp.lt.s32.totalorder %v418, 0
        %v557 = vand.u32 %v418, 2139095040
        %v558 = vshrl.u32 %v557, 23
        %v559 = vsub.s32 %v558, 127
        %v560 = vand.u32 2147483647, %v418
        %v561 = vand.u32 %v560, 8388607
        %v562 = vor.u32 %v561, 8388608
        %v563 = vsub.s32 0, %v562
        %v564 = vadd.s32 %v559, 1
        %vm565 = vcmp.gt.s32.totalorder %v564, 0
        %v566 = vsel %vm565, %v564, 0
        %v567 = vshrl.u32 %v566, 5
        %v568 = vand.u32 %v566, 31
        %v569 = vsub.s32 32, %v568
        %v570 = vshrl.u32 683565275, %v569
        %v571 = vshll.u32 683565275, %v568
        %v572 = vshrl.u32 2475754826, %v569
        %v573 = vor.u32 %v571, %v572
        %v574 = vshll.u32 2475754826, %v568
        %v575 = vshrl.u32 2131351028, %v569
        %v576 = vor.u32 %v574, %v575
        %v577 = vshll.u32 2131351028, %v568
        %v578 = vshrl.u32 2102212464, %v569
        %v579 = vor.u32 %v577, %v578
        %v580 = vshll.u32 2102212464, %v568
        %v581 = vshrl.u32 920167782, %v569
        %v582 = vor.u32 %v580, %v581
        %v583 = vshll.u32 920167782, %v568
        %v584 = vshrl.u32 1326507024, %v569
        %v585 = vor.u32 %v583, %v584
        %vm586 = vcmp.lt.s32.totalorder %v567, 1
        %vm587 = vcmp.lt.s32.totalorder %v567, 2
        %vm588 = vcmp.lt.s32.totalorder %v567, 3
        %vm589 = vcmp.lt.s32.totalorder %v567, 4
        %v590 = vsel %vm586, %v570, %v573
        %v591 = vsel %vm589, %v579, 2102212464
        %v592 = vsel %vm588, %v576, %v591
        %v593 = vsel %vm587, %v590, %v592
        %v594 = vsel %vm586, %v573, %v576
        %v595 = vsel %vm589, %v582, 920167782
        %v596 = vsel %vm588, %v579, %v595
        %v597 = vsel %vm587, %v594, %v596
        %v598 = vsel %vm586, %v576, %v579
        %v599 = vsel %vm589, %v585, 1326507024
        %v600 = vsel %vm588, %v582, %v599
        %v601 = vsel %vm587, %v598, %v600
        %v602 = vshll.u32 %v562, 8
        %v603 = vmul.u32.u64.compose %v602, %v601
        %v604 = vextract.low.u32 %v603
        %v605 = vextract.high.u32 %v603
        %v606 = vmul.u32.u64.compose %v602, %v597
        %v607 = vextract.low.u32 %v606
        %v608 = vextract.high.u32 %v606
        %v609 = vmul.u32 %v602, %v593
        %v610 = vadd.s32 %v605, %v607
        %vm611 = vc.u32 %v605, %v607
        %v612 = vadd.s32 %v608, 1
        %v613 = vsel %vm611, %v612, %v608
        %v614 = vadd.s32 %v609, %v613
        %v615 = vadd.s32 %v614, 536870912
        %v616 = vshrl.u32 %v615, 30
        %v617 = vshll.u32 %v616, 30
        %v618 = vsub.s32 %v614, %v617
        %vm619 = vcmp.lt.s32.totalorder %v618, 0
        %v620 = vsub.s32 0, %v618
        %v621 = vsel %vm619, %v620, %v618
        %v622 = vclz %v621
        %v623 = vsub.s32 %v622, 2
        %vm624 = vcmp.gt.s32.totalorder 0, %v623
        %v625 = vsel %vm624, 0, %v623
        %v626 = vsub.s32 32, %v625
        %v627 = vshll.u32 %v618, %v625
        %v628 = vshrl.u32 %v610, %v626
        %v629 = vor.u32 %v627, %v628
        %v630 = vsub.s32 4294967266, %v625
        %v631 = vadd.s32 %v630, 127
        %v632 = vshll.u32 %v631, 23
        %v633 = vor.u32 4788187, %v632
        %v634 = vand.u32 2147483647, %v633
        %v636 = vcvt.s32.f32 %v629
        %v637 = vmul.f32 %v636, %v634
        %v638 = vxor.u32 %v637, 2147483648
        %v639 = vsel %vm556, %v638, %v637
        %v640 = vsub.s32 4, %v616
        %v641 = vsel %vm556, %v640, %v616
        %v642 = vsel %vm555, %v418, %v639
        %v643 = vsel %vm555, 0, %v641
        %v644 = vcosq.f32.pop %v642
        %v645 = vsinq.f32.pop %v642
        %vm646 = vweird.f32 %v418
        %v647 = vand.u32 %v643, 3
        %vm648 = vcmp.lt.s32.totalorder %v647, 2
        %vm649 = vcmp.eq.s32.totalorder %v647, 0
        %v650 = vxor.u32 %v645, 2147483648
        %v651 = vsel %vm649, %v644, %v650
        %vm652 = vcmp.eq.s32.totalorder %v647, 2
        %v653 = vxor.u32 %v644, 2147483648
        %v654 = vsel %vm652, %v653, %v645
        %v655 = vsel %vm648, %v651, %v654
        %v656 = vsel %vm646, nan, %v655
        %v657 = vand.u32 2147483647, %v423
        %vm658 = vcmp.le.f32.partialorder %v657, 0.7853982
        %vm659 = vcmp.lt.s32.totalorder %v423, 0
        %v660 = vand.u32 %v423, 2139095040
        %v661 = vshrl.u32 %v660, 23
        %v662 = vsub.s32 %v661, 127
        %v663 = vand.u32 2147483647, %v423
        %v664 = vand.u32 %v663, 8388607
        %v665 = vor.u32 %v664, 8388608
        %v666 = vsub.s32 0, %v665
        %v667 = vadd.s32 %v662, 1
        %vm668 = vcmp.gt.s32.totalorder %v667, 0
        %v669 = vsel %vm668, %v667, 0
        %v670 = vshrl.u32 %v669, 5
        %v671 = vand.u32 %v669, 31
        %v672 = vsub.s32 32, %v671
        %v673 = vshrl.u32 683565275, %v672
        %v674 = vshll.u32 683565275, %v671
        %v675 = vshrl.u32 2475754826, %v672
        %v676 = vor.u32 %v674, %v675
        %v677 = vshll.u32 2475754826, %v671
        %v678 = vshrl.u32 2131351028, %v672
        %v679 = vor.u32 %v677, %v678
        %v680 = vshll.u32 2131351028, %v671
        %v681 = vshrl.u32 2102212464, %v672
        %v682 = vor.u32 %v680, %v681
        %v683 = vshll.u32 2102212464, %v671
        %v684 = vshrl.u32 920167782, %v672
        %v685 = vor.u32 %v683, %v684
        %v686 = vshll.u32 920167782, %v671
        %v687 = vshrl.u32 1326507024, %v672
        %v688 = vor.u32 %v686, %v687
        %vm689 = vcmp.lt.s32.totalorder %v670, 1
        %vm690 = vcmp.lt.s32.totalorder %v670, 2
        %vm691 = vcmp.lt.s32.totalorder %v670, 3
        %vm692 = vcmp.lt.s32.totalorder %v670, 4
        %v693 = vsel %vm689, %v673, %v676
        %v694 = vsel %vm692, %v682, 2102212464
        %v695 = vsel %vm691, %v679, %v694
        %v696 = vsel %vm690, %v693, %v695
        %v697 = vsel %vm689, %v676, %v679
        %v698 = vsel %vm692, %v685, 920167782
        %v699 = vsel %vm691, %v682, %v698
        %v700 = vsel %vm690, %v697, %v699
        %v701 = vsel %vm689, %v679, %v682
        %v702 = vsel %vm692, %v688, 1326507024
        %v703 = vsel %vm691, %v685, %v702
        %v704 = vsel %vm690, %v701, %v703
        %v705 = vshll.u32 %v665, 8
        %v706 = vmul.u32.u64.compose %v705, %v704
        %v707 = vextract.low.u32 %v706
        %v708 = vextract.high.u32 %v706
        %v709 = vmul.u32.u64.compose %v705, %v700
        %v710 = vextract.low.u32 %v709
        %v711 = vextract.high.u32 %v709
        %v712 = vmul.u32 %v705, %v696
        %v713 = vadd.s32 %v708, %v710
        %vm714 = vc.u32 %v708, %v710
        %v715 = vadd.s32 %v711, 1
        %v716 = vsel %vm714, %v715, %v711
        %v717 = vadd.s32 %v712, %v716
        %v718 = vadd.s32 %v717, 536870912
        %v719 = vshrl.u32 %v718, 30
        %v720 = vshll.u32 %v719, 30
        %v721 = vsub.s32 %v717, %v720
        %vm722 = vcmp.lt.s32.totalorder %v721, 0
        %v723 = vsub.s32 0, %v721
        %v724 = vsel %vm722, %v723, %v721
        %v725 = vclz %v724
        %v726 = vsub.s32 %v725, 2
        %vm727 = vcmp.gt.s32.totalorder 0, %v726
        %v728 = vsel %vm727, 0, %v726
        %v729 = vsub.s32 32, %v728
        %v730 = vshll.u32 %v721, %v728
        %v731 = vshrl.u32 %v713, %v729
        %v732 = vor.u32 %v730, %v731
        %v733 = vsub.s32 4294967266, %v728
        %v734 = vadd.s32 %v733, 127
        %v735 = vshll.u32 %v734, 23
        %v736 = vor.u32 4788187, %v735
        %v737 = vand.u32 2147483647, %v736
        %v739 = vcvt.s32.f32 %v732
        %v740 = vmul.f32 %v739, %v737
        %v741 = vxor.u32 %v740, 2147483648
        %v742 = vsel %vm659, %v741, %v740
        %v743 = vsub.s32 4, %v719
        %v744 = vsel %vm659, %v743, %v719
        %v745 = vsel %vm658, %v423, %v742
        %v746 = vsel %vm658, 0, %v744
        %v747 = vcosq.f32.pop %v745
        %v748 = vsinq.f32.pop %v745
        %vm749 = vweird.f32 %v423
        %v750 = vand.u32 %v746, 3
        %vm751 = vcmp.lt.s32.totalorder %v750, 2
        %vm752 = vcmp.eq.s32.totalorder %v750, 0
        %v753 = vxor.u32 %v748, 2147483648
        %v754 = vsel %vm752, %v747, %v753
        %vm755 = vcmp.eq.s32.totalorder %v750, 2
        %v756 = vxor.u32 %v747, 2147483648
        %v757 = vsel %vm755, %v756, %v748
        %v758 = vsel %vm751, %v754, %v757
        %v759 = vsel %vm749, nan, %v758
        %v760 = vand.u32 2147483647, %v428
        %vm761 = vcmp.le.f32.partialorder %v760, 0.7853982
        %vm762 = vcmp.lt.s32.totalorder %v428, 0
        %v763 = vand.u32 %v428, 2139095040
        %v764 = vshrl.u32 %v763, 23
        %v765 = vsub.s32 %v764, 127
        %v766 = vand.u32 2147483647, %v428
        %v767 = vand.u32 %v766, 8388607
        %v768 = vor.u32 %v767, 8388608
        %v769 = vsub.s32 0, %v768
        %v770 = vadd.s32 %v765, 1
        %vm771 = vcmp.gt.s32.totalorder %v770, 0
        %v772 = vsel %vm771, %v770, 0
        %v773 = vshrl.u32 %v772, 5
        %v774 = vand.u32 %v772, 31
        %v775 = vsub.s32 32, %v774
        %v776 = vshrl.u32 683565275, %v775
        %v777 = vshll.u32 683565275, %v774
        %v778 = vshrl.u32 2475754826, %v775
        %v779 = vor.u32 %v777, %v778
        %v780 = vshll.u32 2475754826, %v774
        %v781 = vshrl.u32 2131351028, %v775
        %v782 = vor.u32 %v780, %v781
        %v783 = vshll.u32 2131351028, %v774
        %v784 = vshrl.u32 2102212464, %v775
        %v785 = vor.u32 %v783, %v784
        %v786 = vshll.u32 2102212464, %v774
        %v787 = vshrl.u32 920167782, %v775
        %v788 = vor.u32 %v786, %v787
        %v789 = vshll.u32 920167782, %v774
        %v790 = vshrl.u32 1326507024, %v775
        %v791 = vor.u32 %v789, %v790
        %vm792 = vcmp.lt.s32.totalorder %v773, 1
        %vm793 = vcmp.lt.s32.totalorder %v773, 2
        %vm794 = vcmp.lt.s32.totalorder %v773, 3
        %vm795 = vcmp.lt.s32.totalorder %v773, 4
        %v796 = vsel %vm792, %v776, %v779
        %v797 = vsel %vm795, %v785, 2102212464
        %v798 = vsel %vm794, %v782, %v797
        %v799 = vsel %vm793, %v796, %v798
        %v800 = vsel %vm792, %v779, %v782
        %v801 = vsel %vm795, %v788, 920167782
        %v802 = vsel %vm794, %v785, %v801
        %v803 = vsel %vm793, %v800, %v802
        %v804 = vsel %vm792, %v782, %v785
        %v805 = vsel %vm795, %v791, 1326507024
        %v806 = vsel %vm794, %v788, %v805
        %v807 = vsel %vm793, %v804, %v806
        %v808 = vshll.u32 %v768, 8
        %v809 = vmul.u32.u64.compose %v808, %v807
        %v810 = vextract.low.u32 %v809
        %v811 = vextract.high.u32 %v809
        %v812 = vmul.u32.u64.compose %v808, %v803
        %v813 = vextract.low.u32 %v812
        %v814 = vextract.high.u32 %v812
        %v815 = vmul.u32 %v808, %v799
        %v816 = vadd.s32 %v811, %v813
        %vm817 = vc.u32 %v811, %v813
        %v818 = vadd.s32 %v814, 1
        %v819 = vsel %vm817, %v818, %v814
        %v820 = vadd.s32 %v815, %v819
        %v821 = vadd.s32 %v820, 536870912
        %v822 = vshrl.u32 %v821, 30
        %v823 = vshll.u32 %v822, 30
        %v824 = vsub.s32 %v820, %v823
        %vm825 = vcmp.lt.s32.totalorder %v824, 0
        %v826 = vsub.s32 0, %v824
        %v827 = vsel %vm825, %v826, %v824
        %v828 = vclz %v827
        %v829 = vsub.s32 %v828, 2
        %vm830 = vcmp.gt.s32.totalorder 0, %v829
        %v831 = vsel %vm830, 0, %v829
        %v832 = vsub.s32 32, %v831
        %v833 = vshll.u32 %v824, %v831
        %v834 = vshrl.u32 %v816, %v832
        %v835 = vor.u32 %v833, %v834
        %v836 = vsub.s32 4294967266, %v831
        %v837 = vadd.s32 %v836, 127
        %v838 = vshll.u32 %v837, 23
        %v839 = vor.u32 4788187, %v838
        %v840 = vand.u32 2147483647, %v839
        %v842 = vcvt.s32.f32 %v835
        %v843 = vmul.f32 %v842, %v840
        %v844 = vxor.u32 %v843, 2147483648
        %v845 = vsel %vm762, %v844, %v843
        %v846 = vsub.s32 4, %v822
        %v847 = vsel %vm762, %v846, %v822
        %v848 = vsel %vm761, %v428, %v845
        %v849 = vsel %vm761, 0, %v847
        %v850 = vcosq.f32.pop %v848
        %v851 = vsinq.f32.pop %v848
        %vm852 = vweird.f32 %v428
        %v853 = vand.u32 %v849, 3
        %vm854 = vcmp.lt.s32.totalorder %v853, 2
        %vm855 = vcmp.eq.s32.totalorder %v853, 0
        %v856 = vxor.u32 %v851, 2147483648
        %v857 = vsel %vm855, %v850, %v856
        %vm858 = vcmp.eq.s32.totalorder %v853, 2
        %v859 = vxor.u32 %v850, 2147483648
        %v860 = vsel %vm858, %v859, %v851
        %v861 = vsel %vm854, %v857, %v860
        %v862 = vsel %vm852, nan, %v861
        %v863 = vand.u32 2147483647, %v433
        %vm864 = vcmp.le.f32.partialorder %v863, 0.7853982
        %vm865 = vcmp.lt.s32.totalorder %v433, 0
        %v866 = vand.u32 %v433, 2139095040
        %v867 = vshrl.u32 %v866, 23
        %v868 = vsub.s32 %v867, 127
        %v869 = vand.u32 2147483647, %v433
        %v870 = vand.u32 %v869, 8388607
        %v871 = vor.u32 %v870, 8388608
        %v872 = vsub.s32 0, %v871
        %v873 = vadd.s32 %v868, 1
        %vm874 = vcmp.gt.s32.totalorder %v873, 0
        %v875 = vsel %vm874, %v873, 0
        %v876 = vshrl.u32 %v875, 5
        %v877 = vand.u32 %v875, 31
        %v878 = vsub.s32 32, %v877
        %v879 = vshrl.u32 683565275, %v878
        %v880 = vshll.u32 683565275, %v877
        %v881 = vshrl.u32 2475754826, %v878
        %v882 = vor.u32 %v880, %v881
        %v883 = vshll.u32 2475754826, %v877
        %v884 = vshrl.u32 2131351028, %v878
        %v885 = vor.u32 %v883, %v884
        %v886 = vshll.u32 2131351028, %v877
        %v887 = vshrl.u32 2102212464, %v878
        %v888 = vor.u32 %v886, %v887
        %v889 = vshll.u32 2102212464, %v877
        %v890 = vshrl.u32 920167782, %v878
        %v891 = vor.u32 %v889, %v890
        %v892 = vshll.u32 920167782, %v877
        %v893 = vshrl.u32 1326507024, %v878
        %v894 = vor.u32 %v892, %v893
        %vm895 = vcmp.lt.s32.totalorder %v876, 1
        %vm896 = vcmp.lt.s32.totalorder %v876, 2
        %vm897 = vcmp.lt.s32.totalorder %v876, 3
        %vm898 = vcmp.lt.s32.totalorder %v876, 4
        %v899 = vsel %vm895, %v879, %v882
        %v900 = vsel %vm898, %v888, 2102212464
        %v901 = vsel %vm897, %v885, %v900
        %v902 = vsel %vm896, %v899, %v901
        %v903 = vsel %vm895, %v882, %v885
        %v904 = vsel %vm898, %v891, 920167782
        %v905 = vsel %vm897, %v888, %v904
        %v906 = vsel %vm896, %v903, %v905
        %v907 = vsel %vm895, %v885, %v888
        %v908 = vsel %vm898, %v894, 1326507024
        %v909 = vsel %vm897, %v891, %v908
        %v910 = vsel %vm896, %v907, %v909
        %v911 = vshll.u32 %v871, 8
        %v912 = vmul.u32.u64.compose %v911, %v910
        %v913 = vextract.low.u32 %v912
        %v914 = vextract.high.u32 %v912
        %v915 = vmul.u32.u64.compose %v911, %v906
        %v916 = vextract.low.u32 %v915
        %v917 = vextract.high.u32 %v915
        %v918 = vmul.u32 %v911, %v902
        %v919 = vadd.s32 %v914, %v916
        %vm920 = vc.u32 %v914, %v916
        %v921 = vadd.s32 %v917, 1
        %v922 = vsel %vm920, %v921, %v917
        %v923 = vadd.s32 %v918, %v922
        %v924 = vadd.s32 %v923, 536870912
        %v925 = vshrl.u32 %v924, 30
        %v926 = vshll.u32 %v925, 30
        %v927 = vsub.s32 %v923, %v926
        %vm928 = vcmp.lt.s32.totalorder %v927, 0
        %v929 = vsub.s32 0, %v927
        %v930 = vsel %vm928, %v929, %v927
        %v931 = vclz %v930
        %v932 = vsub.s32 %v931, 2
        %vm933 = vcmp.gt.s32.totalorder 0, %v932
        %v934 = vsel %vm933, 0, %v932
        %v935 = vsub.s32 32, %v934
        %v936 = vshll.u32 %v927, %v934
        %v937 = vshrl.u32 %v919, %v935
        %v938 = vor.u32 %v936, %v937
        %v939 = vsub.s32 4294967266, %v934
        %v940 = vadd.s32 %v939, 127
        %v941 = vshll.u32 %v940, 23
        %v942 = vor.u32 4788187, %v941
        %v943 = vand.u32 2147483647, %v942
        %v945 = vcvt.s32.f32 %v938
        %v946 = vmul.f32 %v945, %v943
        %v947 = vxor.u32 %v946, 2147483648
        %v948 = vsel %vm865, %v947, %v946
        %v949 = vsub.s32 4, %v925
        %v950 = vsel %vm865, %v949, %v925
        %v951 = vsel %vm864, %v433, %v948
        %v952 = vsel %vm864, 0, %v950
        %v953 = vcosq.f32.pop %v951
        %v954 = vsinq.f32.pop %v951
        %vm955 = vweird.f32 %v433
        %v956 = vand.u32 %v952, 3
        %vm957 = vcmp.lt.s32.totalorder %v956, 2
        %vm958 = vcmp.eq.s32.totalorder %v956, 0
        %v959 = vxor.u32 %v954, 2147483648
        %v960 = vsel %vm958, %v953, %v959
        %vm961 = vcmp.eq.s32.totalorder %v956, 2
        %v962 = vxor.u32 %v953, 2147483648
        %v963 = vsel %vm961, %v962, %v954
        %v964 = vsel %vm957, %v960, %v963
        %v965 = vsel %vm955, nan, %v964
        %v966 = vand.u32 2147483647, %v438
        %vm967 = vcmp.le.f32.partialorder %v966, 0.7853982
        %vm968 = vcmp.lt.s32.totalorder %v438, 0
        %v969 = vand.u32 %v438, 2139095040
        %v970 = vshrl.u32 %v969, 23
        %v971 = vsub.s32 %v970, 127
        %v972 = vand.u32 2147483647, %v438
        %v973 = vand.u32 %v972, 8388607
        %v974 = vor.u32 %v973, 8388608
        %v975 = vsub.s32 0, %v974
        %v976 = vadd.s32 %v971, 1
        %vm977 = vcmp.gt.s32.totalorder %v976, 0
        %v978 = vsel %vm977, %v976, 0
        %v979 = vshrl.u32 %v978, 5
        %v980 = vand.u32 %v978, 31
        %v981 = vsub.s32 32, %v980
        %v982 = vshrl.u32 683565275, %v981
        %v983 = vshll.u32 683565275, %v980
        %v984 = vshrl.u32 2475754826, %v981
        %v985 = vor.u32 %v983, %v984
        %v986 = vshll.u32 2475754826, %v980
        %v987 = vshrl.u32 2131351028, %v981
        %v988 = vor.u32 %v986, %v987
        %v989 = vshll.u32 2131351028, %v980
        %v990 = vshrl.u32 2102212464, %v981
        %v991 = vor.u32 %v989, %v990
        %v992 = vshll.u32 2102212464, %v980
        %v993 = vshrl.u32 920167782, %v981
        %v994 = vor.u32 %v992, %v993
        %v995 = vshll.u32 920167782, %v980
        %v996 = vshrl.u32 1326507024, %v981
        %v997 = vor.u32 %v995, %v996
        %vm998 = vcmp.lt.s32.totalorder %v979, 1
        %vm999 = vcmp.lt.s32.totalorder %v979, 2
        %vm1000 = vcmp.lt.s32.totalorder %v979, 3
        %vm1001 = vcmp.lt.s32.totalorder %v979, 4
        %v1002 = vsel %vm998, %v982, %v985
        %v1003 = vsel %vm1001, %v991, 2102212464
        %v1004 = vsel %vm1000, %v988, %v1003
        %v1005 = vsel %vm999, %v1002, %v1004
        %v1006 = vsel %vm998, %v985, %v988
        %v1007 = vsel %vm1001, %v994, 920167782
        %v1008 = vsel %vm1000, %v991, %v1007
        %v1009 = vsel %vm999, %v1006, %v1008
        %v1010 = vsel %vm998, %v988, %v991
        %v1011 = vsel %vm1001, %v997, 1326507024
        %v1012 = vsel %vm1000, %v994, %v1011
        %v1013 = vsel %vm999, %v1010, %v1012
        %v1014 = vshll.u32 %v974, 8
        %v1015 = vmul.u32.u64.compose %v1014, %v1013
        %v1016 = vextract.low.u32 %v1015
        %v1017 = vextract.high.u32 %v1015
        %v1018 = vmul.u32.u64.compose %v1014, %v1009
        %v1019 = vextract.low.u32 %v1018
        %v1020 = vextract.high.u32 %v1018
        %v1021 = vmul.u32 %v1014, %v1005
        %v1022 = vadd.s32 %v1017, %v1019
        %vm1023 = vc.u32 %v1017, %v1019
        %v1024 = vadd.s32 %v1020, 1
        %v1025 = vsel %vm1023, %v1024, %v1020
        %v1026 = vadd.s32 %v1021, %v1025
        %v1027 = vadd.s32 %v1026, 536870912
        %v1028 = vshrl.u32 %v1027, 30
        %v1029 = vshll.u32 %v1028, 30
        %v1030 = vsub.s32 %v1026, %v1029
        %vm1031 = vcmp.lt.s32.totalorder %v1030, 0
        %v1032 = vsub.s32 0, %v1030
        %v1033 = vsel %vm1031, %v1032, %v1030
        %v1034 = vclz %v1033
        %v1035 = vsub.s32 %v1034, 2
        %vm1036 = vcmp.gt.s32.totalorder 0, %v1035
        %v1037 = vsel %vm1036, 0, %v1035
        %v1038 = vsub.s32 32, %v1037
        %v1039 = vshll.u32 %v1030, %v1037
        %v1040 = vshrl.u32 %v1022, %v1038
        %v1041 = vor.u32 %v1039, %v1040
        %v1042 = vsub.s32 4294967266, %v1037
        %v1043 = vadd.s32 %v1042, 127
        %v1044 = vshll.u32 %v1043, 23
        %v1045 = vor.u32 4788187, %v1044
        %v1046 = vand.u32 2147483647, %v1045
        %v1048 = vcvt.s32.f32 %v1041
        %v1049 = vmul.f32 %v1048, %v1046
        %v1050 = vxor.u32 %v1049, 2147483648
        %v1051 = vsel %vm968, %v1050, %v1049
        %v1052 = vsub.s32 4, %v1028
        %v1053 = vsel %vm968, %v1052, %v1028
        %v1054 = vsel %vm967, %v438, %v1051
        %v1055 = vsel %vm967, 0, %v1053
        %v1056 = vcosq.f32.pop %v1054
        %v1057 = vsinq.f32.pop %v1054
        %vm1058 = vweird.f32 %v438
        %v1059 = vand.u32 %v1055, 3
        %vm1060 = vcmp.lt.s32.totalorder %v1059, 2
        %vm1061 = vcmp.eq.s32.totalorder %v1059, 0
        %v1062 = vxor.u32 %v1057, 2147483648
        %v1063 = vsel %vm1061, %v1056, %v1062
        %vm1064 = vcmp.eq.s32.totalorder %v1059, 2
        %v1065 = vxor.u32 %v1056, 2147483648
        %v1066 = vsel %vm1064, %v1065, %v1057
        %v1067 = vsel %vm1060, %v1063, %v1066
        %v1068 = vsel %vm1058, nan, %v1067
        %v1069 = vand.u32 2147483647, %v443
        %vm1070 = vcmp.le.f32.partialorder %v1069, 0.7853982
        %vm1071 = vcmp.lt.s32.totalorder %v443, 0
        %v1072 = vand.u32 %v443, 2139095040
        %v1073 = vshrl.u32 %v1072, 23
        %v1074 = vsub.s32 %v1073, 127
        %v1075 = vand.u32 2147483647, %v443
        %v1076 = vand.u32 %v1075, 8388607
        %v1077 = vor.u32 %v1076, 8388608
        %v1078 = vsub.s32 0, %v1077
        %v1079 = vadd.s32 %v1074, 1
        %vm1080 = vcmp.gt.s32.totalorder %v1079, 0
        %v1081 = vsel %vm1080, %v1079, 0
        %v1082 = vshrl.u32 %v1081, 5
        %v1083 = vand.u32 %v1081, 31
        %v1084 = vsub.s32 32, %v1083
        %v1085 = vshrl.u32 683565275, %v1084
        %v1086 = vshll.u32 683565275, %v1083
        %v1087 = vshrl.u32 2475754826, %v1084
        %v1088 = vor.u32 %v1086, %v1087
        %v1089 = vshll.u32 2475754826, %v1083
        %v1090 = vshrl.u32 2131351028, %v1084
        %v1091 = vor.u32 %v1089, %v1090
        %v1092 = vshll.u32 2131351028, %v1083
        %v1093 = vshrl.u32 2102212464, %v1084
        %v1094 = vor.u32 %v1092, %v1093
        %v1095 = vshll.u32 2102212464, %v1083
        %v1096 = vshrl.u32 920167782, %v1084
        %v1097 = vor.u32 %v1095, %v1096
        %v1098 = vshll.u32 920167782, %v1083
        %v1099 = vshrl.u32 1326507024, %v1084
        %v1100 = vor.u32 %v1098, %v1099
        %vm1101 = vcmp.lt.s32.totalorder %v1082, 1
        %vm1102 = vcmp.lt.s32.totalorder %v1082, 2
        %vm1103 = vcmp.lt.s32.totalorder %v1082, 3
        %vm1104 = vcmp.lt.s32.totalorder %v1082, 4
        %v1105 = vsel %vm1101, %v1085, %v1088
        %v1106 = vsel %vm1104, %v1094, 2102212464
        %v1107 = vsel %vm1103, %v1091, %v1106
        %v1108 = vsel %vm1102, %v1105, %v1107
        %v1109 = vsel %vm1101, %v1088, %v1091
        %v1110 = vsel %vm1104, %v1097, 920167782
        %v1111 = vsel %vm1103, %v1094, %v1110
        %v1112 = vsel %vm1102, %v1109, %v1111
        %v1113 = vsel %vm1101, %v1091, %v1094
        %v1114 = vsel %vm1104, %v1100, 1326507024
        %v1115 = vsel %vm1103, %v1097, %v1114
        %v1116 = vsel %vm1102, %v1113, %v1115
        %v1117 = vshll.u32 %v1077, 8
        %v1118 = vmul.u32.u64.compose %v1117, %v1116
        %v1119 = vextract.low.u32 %v1118
        %v1120 = vextract.high.u32 %v1118
        %v1121 = vmul.u32.u64.compose %v1117, %v1112
        %v1122 = vextract.low.u32 %v1121
        %v1123 = vextract.high.u32 %v1121
        %v1124 = vmul.u32 %v1117, %v1108
        %v1125 = vadd.s32 %v1120, %v1122
        %vm1126 = vc.u32 %v1120, %v1122
        %v1127 = vadd.s32 %v1123, 1
        %v1128 = vsel %vm1126, %v1127, %v1123
        %v1129 = vadd.s32 %v1124, %v1128
        %v1130 = vadd.s32 %v1129, 536870912
        %v1131 = vshrl.u32 %v1130, 30
        %v1132 = vshll.u32 %v1131, 30
        %v1133 = vsub.s32 %v1129, %v1132
        %vm1134 = vcmp.lt.s32.totalorder %v1133, 0
        %v1135 = vsub.s32 0, %v1133
        %v1136 = vsel %vm1134, %v1135, %v1133
        %v1137 = vclz %v1136
        %v1138 = vsub.s32 %v1137, 2
        %vm1139 = vcmp.gt.s32.totalorder 0, %v1138
        %v1140 = vsel %vm1139, 0, %v1138
        %v1141 = vsub.s32 32, %v1140
        %v1142 = vshll.u32 %v1133, %v1140
        %v1143 = vshrl.u32 %v1125, %v1141
        %v1144 = vor.u32 %v1142, %v1143
        %v1145 = vsub.s32 4294967266, %v1140
        %v1146 = vadd.s32 %v1145, 127
        %v1147 = vshll.u32 %v1146, 23
        %v1148 = vor.u32 4788187, %v1147
        %v1149 = vand.u32 2147483647, %v1148
        %v1151 = vcvt.s32.f32 %v1144
        %v1152 = vmul.f32 %v1151, %v1149
        %v1153 = vxor.u32 %v1152, 2147483648
        %v1154 = vsel %vm1071, %v1153, %v1152
        %v1155 = vsub.s32 4, %v1131
        %v1156 = vsel %vm1071, %v1155, %v1131
        %v1157 = vsel %vm1070, %v443, %v1154
        %v1158 = vsel %vm1070, 0, %v1156
        %v1159 = vcosq.f32.pop %v1157
        %v1160 = vsinq.f32.pop %v1157
        %vm1161 = vweird.f32 %v443
        %v1162 = vand.u32 %v1158, 3
        %vm1163 = vcmp.lt.s32.totalorder %v1162, 2
        %vm1164 = vcmp.eq.s32.totalorder %v1162, 0
        %v1165 = vxor.u32 %v1160, 2147483648
        %v1166 = vsel %vm1164, %v1159, %v1165
        %vm1167 = vcmp.eq.s32.totalorder %v1162, 2
        %v1168 = vxor.u32 %v1159, 2147483648
        %v1169 = vsel %vm1167, %v1168, %v1160
        %v1170 = vsel %vm1163, %v1166, %v1169
        %v1171 = vsel %vm1161, nan, %v1170
        %v1172 = vand.u32 2147483647, %v448
        %vm1173 = vcmp.le.f32.partialorder %v1172, 0.7853982
        %vm1174 = vcmp.lt.s32.totalorder %v448, 0
        %v1175 = vand.u32 %v448, 2139095040
        %v1176 = vshrl.u32 %v1175, 23
        %v1177 = vsub.s32 %v1176, 127
        %v1178 = vand.u32 2147483647, %v448
        %v1179 = vand.u32 %v1178, 8388607
        %v1180 = vor.u32 %v1179, 8388608
        %v1181 = vsub.s32 0, %v1180
        %v1182 = vadd.s32 %v1177, 1
        %vm1183 = vcmp.gt.s32.totalorder %v1182, 0
        %v1184 = vsel %vm1183, %v1182, 0
        %v1185 = vshrl.u32 %v1184, 5
        %v1186 = vand.u32 %v1184, 31
        %v1187 = vsub.s32 32, %v1186
        %v1188 = vshrl.u32 683565275, %v1187
        %v1189 = vshll.u32 683565275, %v1186
        %v1190 = vshrl.u32 2475754826, %v1187
        %v1191 = vor.u32 %v1189, %v1190
        %v1192 = vshll.u32 2475754826, %v1186
        %v1193 = vshrl.u32 2131351028, %v1187
        %v1194 = vor.u32 %v1192, %v1193
        %v1195 = vshll.u32 2131351028, %v1186
        %v1196 = vshrl.u32 2102212464, %v1187
        %v1197 = vor.u32 %v1195, %v1196
        %v1198 = vshll.u32 2102212464, %v1186
        %v1199 = vshrl.u32 920167782, %v1187
        %v1200 = vor.u32 %v1198, %v1199
        %v1201 = vshll.u32 920167782, %v1186
        %v1202 = vshrl.u32 1326507024, %v1187
        %v1203 = vor.u32 %v1201, %v1202
        %vm1204 = vcmp.lt.s32.totalorder %v1185, 1
        %vm1205 = vcmp.lt.s32.totalorder %v1185, 2
        %vm1206 = vcmp.lt.s32.totalorder %v1185, 3
        %vm1207 = vcmp.lt.s32.totalorder %v1185, 4
        %v1208 = vsel %vm1204, %v1188, %v1191
        %v1209 = vsel %vm1207, %v1197, 2102212464
        %v1210 = vsel %vm1206, %v1194, %v1209
        %v1211 = vsel %vm1205, %v1208, %v1210
        %v1212 = vsel %vm1204, %v1191, %v1194
        %v1213 = vsel %vm1207, %v1200, 920167782
        %v1214 = vsel %vm1206, %v1197, %v1213
        %v1215 = vsel %vm1205, %v1212, %v1214
        %v1216 = vsel %vm1204, %v1194, %v1197
        %v1217 = vsel %vm1207, %v1203, 1326507024
        %v1218 = vsel %vm1206, %v1200, %v1217
        %v1219 = vsel %vm1205, %v1216, %v1218
        %v1220 = vshll.u32 %v1180, 8
        %v1221 = vmul.u32.u64.compose %v1220, %v1219
        %v1222 = vextract.low.u32 %v1221
        %v1223 = vextract.high.u32 %v1221
        %v1224 = vmul.u32.u64.compose %v1220, %v1215
        %v1225 = vextract.low.u32 %v1224
        %v1226 = vextract.high.u32 %v1224
        %v1227 = vmul.u32 %v1220, %v1211
        %v1228 = vadd.s32 %v1223, %v1225
        %vm1229 = vc.u32 %v1223, %v1225
        %v1230 = vadd.s32 %v1226, 1
        %v1231 = vsel %vm1229, %v1230, %v1226
        %v1232 = vadd.s32 %v1227, %v1231
        %v1233 = vadd.s32 %v1232, 536870912
        %v1234 = vshrl.u32 %v1233, 30
        %v1235 = vshll.u32 %v1234, 30
        %v1236 = vsub.s32 %v1232, %v1235
        %vm1237 = vcmp.lt.s32.totalorder %v1236, 0
        %v1238 = vsub.s32 0, %v1236
        %v1239 = vsel %vm1237, %v1238, %v1236
        %v1240 = vclz %v1239
        %v1241 = vsub.s32 %v1240, 2
        %vm1242 = vcmp.gt.s32.totalorder 0, %v1241
        %v1243 = vsel %vm1242, 0, %v1241
        %v1244 = vsub.s32 32, %v1243
        %v1245 = vshll.u32 %v1236, %v1243
        %v1246 = vshrl.u32 %v1228, %v1244
        %v1247 = vor.u32 %v1245, %v1246
        %v1248 = vsub.s32 4294967266, %v1243
        %v1249 = vadd.s32 %v1248, 127
        %v1250 = vshll.u32 %v1249, 23
        %v1251 = vor.u32 4788187, %v1250
        %v1252 = vand.u32 2147483647, %v1251
        %v1254 = vcvt.s32.f32 %v1247
        %v1255 = vmul.f32 %v1254, %v1252
        %v1256 = vxor.u32 %v1255, 2147483648
        %v1257 = vsel %vm1174, %v1256, %v1255
        %v1258 = vsub.s32 4, %v1234
        %v1259 = vsel %vm1174, %v1258, %v1234
        %v1260 = vsel %vm1173, %v448, %v1257
        %v1261 = vsel %vm1173, 0, %v1259
        %v1262 = vcosq.f32.pop %v1260
        %v1263 = vsinq.f32.pop %v1260
        %vm1264 = vweird.f32 %v448
        %v1265 = vand.u32 %v1261, 3
        %vm1266 = vcmp.lt.s32.totalorder %v1265, 2
        %vm1267 = vcmp.eq.s32.totalorder %v1265, 0
        %v1268 = vxor.u32 %v1263, 2147483648
        %v1269 = vsel %vm1267, %v1262, %v1268
        %vm1270 = vcmp.eq.s32.totalorder %v1265, 2
        %v1271 = vxor.u32 %v1262, 2147483648
        %v1272 = vsel %vm1270, %v1271, %v1263
        %v1273 = vsel %vm1266, %v1269, %v1272
        %v1274 = vsel %vm1264, nan, %v1273
        %v1275 = vld [vmem:[%s4] sm:$0xf]
        %vm1276 = vcmask 261120
        %v1278 = vsel %vm1276, %v1275, 0
        %1280 = vmatprep.subr.mxu0 0.0
        %1281 = vmatpush1.msra.mxu0 %v553
        %1282 = vmatprep.subr.mxu0 0.0
        %1283 = vmatpush1.msra.mxu0 %v656
        %1284 = vmatprep.subr.mxu0 0.0
        %1285 = vmatpush1.msra.mxu0 %v759
        %1286 = vmatprep.subr.mxu0 0.0
        %1287 = vmatpush1.msra.mxu0 %v862
        %1288 = vmatprep.subr.mxu0 0.0
        %1289 = vmatpush1.msra.mxu0 0.0
        %1290 = vmatprep.subr.mxu0 0.0
        %1291 = vmatpush1.msra.mxu0 0.0
        %1292 = vmatprep.subr.mxu0 0.0
        %1293 = vmatpush1.msra.mxu0 0.0
        %1294 = vmatprep.subr.mxu0 0.0
        %1295 = vmatpush1.msra.mxu0 0.0
        %1296 = vmatprep.subr.mxu0 0.0
        %1297 = vmatpush1.msra.mxu0 0.0
        %1298 = vmatprep.subr.mxu0 0.0
        %1299 = vmatpush1.msra.mxu0 0.0
        %1300 = vmatprep.subr.mxu0 0.0
        %1301 = vmatpush1.msra.mxu0 0.0
        %1302 = vmatprep.subr.mxu0 0.0
        %1303 = vmatpush1.msra.mxu0 0.0
        %1304 = vmatprep.subr.mxu0 0.0
        %1305 = vmatpush1.msra.mxu0 0.0
        %1306 = vmatprep.subr.mxu0 0.0
        %1307 = vmatpush1.msra.mxu0 0.0
        %1308 = vmatprep.subr.mxu0 0.0
        %1309 = vmatpush1.msra.mxu0 0.0
        %1310 = vmatprep.subr.mxu0 0.0
        %1311 = vmatpush1.msra.mxu0 0.0
        %1312 = vmatprep.subr.mxu0 0.0
        %1313 = vmatpush1.msra.mxu0 0.0
        %1314 = vmatprep.subr.mxu0 0.0
        %1315 = vmatpush1.msra.mxu0 0.0
        %1316 = vmatprep.subr.mxu0 0.0
        %1317 = vmatpush1.msra.mxu0 0.0
        %1318 = vmatprep.subr.mxu0 0.0
        %1319 = vmatpush1.msra.mxu0 0.0
        %1320 = vmatprep.subr.mxu0 0.0
        %1321 = vmatpush1.msra.mxu0 0.0
        %1322 = vmatprep.subr.mxu0 0.0
        %1323 = vmatpush1.msra.mxu0 0.0
        %1324 = vmatprep.subr.mxu0 0.0
        %1325 = vmatpush1.msra.mxu0 0.0
        %1326 = vmatprep.subr.mxu0 0.0
        %1327 = vmatpush1.msra.mxu0 0.0
        %1328 = vmatprep.subr.mxu0 0.0
        %1329 = vmatpush1.msra.mxu0 0.0
        %1330 = vmatprep.subr.mxu0 0.0
        %1331 = vmatpush1.msra.mxu0 0.0
        %1332 = vmatprep.subr.mxu0 0.0
        %1333 = vmatpush1.msra.mxu0 0.0
        %1334 = vmatprep.subr.mxu0 0.0
        %1335 = vmatpush1.msra.mxu0 0.0
        %1336 = vmatprep.subr.mxu0 0.0
        %1337 = vmatpush1.msra.mxu0 0.0
        %1338 = vmatprep.subr.mxu0 0.0
        %1339 = vmatpush1.msra.mxu0 0.0
        %1340 = vmatprep.subr.mxu0 0.0
        %1341 = vmatpush1.msra.mxu0 0.0
        %1342 = vmatprep.subr.mxu0 0.0
        %1343 = vmatpush1.msra.mxu0 0.0
        %1344 = vmatprep.mubr.f32.mxu0 0.0
        %1345 = vmatmul.mubr.f32.gmra.mrb[0].mxu0 %v1278
        %v1346 = vpop.f32.mrb[0].mxu0
        %v1347 = vadd.f32 0.0, %v1346
        %v1348 = vpop.f32.mrb[0].mxu0
        %1349 = vdwg.mxu0
        %v1350 = vmul.f32 %v1347, %v253
        %v1351 = vld [vmem:[%s5] sm:$0xf]
        %v1353 = vsel %vm1276, %v1351, 0
        %1355 = vmatprep.subr.mxu0 0.0
        %1356 = vmatpush1.msra.mxu0 %v965
        %1357 = vmatprep.subr.mxu0 0.0
        %1358 = vmatpush1.msra.mxu0 %v1068
        %1359 = vmatprep.subr.mxu0 0.0
        %1360 = vmatpush1.msra.mxu0 %v1171
        %1361 = vmatprep.subr.mxu0 0.0
        %1362 = vmatpush1.msra.mxu0 %v1274
        %1363 = vmatprep.subr.mxu0 0.0
        %1364 = vmatpush1.msra.mxu0 0.0
        %1365 = vmatprep.subr.mxu0 0.0
        %1366 = vmatpush1.msra.mxu0 0.0
        %1367 = vmatprep.subr.mxu0 0.0
        %1368 = vmatpush1.msra.mxu0 0.0
        %1369 = vmatprep.subr.mxu0 0.0
        %1370 = vmatpush1.msra.mxu0 0.0
        %1371 = vmatprep.subr.mxu0 0.0
        %1372 = vmatpush1.msra.mxu0 0.0
        %1373 = vmatprep.subr.mxu0 0.0
        %1374 = vmatpush1.msra.mxu0 0.0
        %1375 = vmatprep.subr.mxu0 0.0
        %1376 = vmatpush1.msra.mxu0 0.0
        %1377 = vmatprep.subr.mxu0 0.0
        %1378 = vmatpush1.msra.mxu0 0.0
        %1379 = vmatprep.subr.mxu0 0.0
        %1380 = vmatpush1.msra.mxu0 0.0
        %1381 = vmatprep.subr.mxu0 0.0
        %1382 = vmatpush1.msra.mxu0 0.0
        %1383 = vmatprep.subr.mxu0 0.0
        %1384 = vmatpush1.msra.mxu0 0.0
        %1385 = vmatprep.subr.mxu0 0.0
        %1386 = vmatpush1.msra.mxu0 0.0
        %1387 = vmatprep.subr.mxu0 0.0
        %1388 = vmatpush1.msra.mxu0 0.0
        %1389 = vmatprep.subr.mxu0 0.0
        %1390 = vmatpush1.msra.mxu0 0.0
        %1391 = vmatprep.subr.mxu0 0.0
        %1392 = vmatpush1.msra.mxu0 0.0
        %1393 = vmatprep.subr.mxu0 0.0
        %1394 = vmatpush1.msra.mxu0 0.0
        %1395 = vmatprep.subr.mxu0 0.0
        %1396 = vmatpush1.msra.mxu0 0.0
        %1397 = vmatprep.subr.mxu0 0.0
        %1398 = vmatpush1.msra.mxu0 0.0
        %1399 = vmatprep.subr.mxu0 0.0
        %1400 = vmatpush1.msra.mxu0 0.0
        %1401 = vmatprep.subr.mxu0 0.0
        %1402 = vmatpush1.msra.mxu0 0.0
        %1403 = vmatprep.subr.mxu0 0.0
        %1404 = vmatpush1.msra.mxu0 0.0
        %1405 = vmatprep.subr.mxu0 0.0
        %1406 = vmatpush1.msra.mxu0 0.0
        %1407 = vmatprep.subr.mxu0 0.0
        %1408 = vmatpush1.msra.mxu0 0.0
        %1409 = vmatprep.subr.mxu0 0.0
        %1410 = vmatpush1.msra.mxu0 0.0
        %1411 = vmatprep.subr.mxu0 0.0
        %1412 = vmatpush1.msra.mxu0 0.0
        %1413 = vmatprep.subr.mxu0 0.0
        %1414 = vmatpush1.msra.mxu0 0.0
        %1415 = vmatprep.subr.mxu0 0.0
        %1416 = vmatpush1.msra.mxu0 0.0
        %1417 = vmatprep.subr.mxu0 0.0
        %1418 = vmatpush1.msra.mxu0 0.0
        %1419 = vmatprep.mubr.f32.mxu0 0.0
        %1420 = vmatmul.mubr.f32.gmra.mrb[0].mxu0 %v1353
        %v1421 = vpop.f32.mrb[0].mxu0
        %v1422 = vadd.f32 0.0, %v1421
        %v1423 = vpop.f32.mrb[0].mxu0
        %1424 = vdwg.mxu0
        %v1425 = vmul.f32 %v1422, %v253
        %v1426 = vmul.f32 %v1350, 1.442695
        %v1427 = vpow.pop %v1426
        %v1428 = vmul.f32 %v247, %v1427
        %v1429 = vadd.f32 %v1428, %v1425
        %1430 = vst [vmem:[%s242] sm:$0xf] %v1429
        %s1431 = sand.u32 %s159, 1
        %s1432 = scalar_lea.sflag [#allocation3], %s1431
        %s1433 = sand.u32 %s159, 1
        %s1434 = smul.addr %s1433, 4
        %s1435 = scalar_lea.vmem [#allocation2], %s1434
        // Predicated region
        $region45: #{_coupling_layer_forward.1} parent=43 // pred_check
          %p1436 = pneg %p169
        $region46: #{_coupling_layer_forward.1} parent=43 // pred_check_branch
          %1438 = sbr.rel (%p1436) target = $region48
        $region47: #{_coupling_layer_forward.1} parent=43 // pred_region
          %s1440 = ssub.s32 64, 64
          %1441 = vsyncadd %s1432, %s1440
          %s1442 = smul.addr %s20, 64
          %s1443 = scalar_lea.hbm %s6, %s1442
          %s1445 = sshll.u32 %s1435, 4
          %s1446 = int_to_ptr.vmem [resolvable:$true] %s1445
          %1448 = dma.vmem_to_hbm [thread:$0]  %s1446, 64, %s1443, %s1432
        $region48: #{_coupling_layer_forward.1} parent=43 // pred_fallthru
          _
      $region44: #{_coupling_layer_forward.1} parent=5 // pred_fallthru
        _
      %p1449 = scmp.le.s32.totalorder 2, %s15
      // Predicated region
      $region49: #{_coupling_layer_forward.1} parent=5 // pred_check
        %p1450 = pneg %p1449
      $region50: #{_coupling_layer_forward.1} parent=5 // pred_check_branch
        %1452 = sbr.rel (%p1450) target = $region52
      $region51: #{_coupling_layer_forward.1} parent=5 // pred_region
        %s1453 = ssub.s32 %s15, 2
        // Predicated region
        $region53: #{_coupling_layer_forward.1} parent=51 // pred_check
          %p1454 = pneg %p175
        $region54: #{_coupling_layer_forward.1} parent=51 // pred_check_branch
          %1456 = sbr.rel (%p1454) target = $region56
        $region55: #{_coupling_layer_forward.1} parent=51 // pred_region
          %s1457 = sand.u32 %s160, 1
          %s1458 = scalar_lea.sflag [#allocation3], %s1457
          %s1459 = sand.u32 %s160, 1
          %s1460 = smul.addr %s1459, 4
          %s1461 = scalar_lea.vmem [#allocation2], %s1460
          %1462 = dma.done %s1458, 64
        $region56: #{_coupling_layer_forward.1} parent=51 // pred_fallthru
          _
      $region52: #{_coupling_layer_forward.1} parent=5 // pred_fallthru
        _
    $region6: #{_coupling_layer_forward.1} parent=1 // loop_footer
      %s19 = sadd.s32 1, %s15
    $region7: #{_coupling_layer_forward.1} parent=1 // loop_footer_branch
      %14 = sbr.rel target = $region3
    $region8: #{_coupling_layer_forward.1} parent=1 // loop_exit
      _
    %1463 = vsyncpa [#allocation3], 1
    %s1464 = scalar_lea.sflag [#allocation3], 1
    %1465 = vsyncpa %s1464, 1

</llo_original>
